<compile_context>
chip_gen: v7x
topology: tpu7x:2x2x1
jax: 0.10.0
libtpu: 0.0.40
codegen_flags: <defaults>
</compile_context>

<pallas_src>
import math
import numpy as np
import jax
import jax.numpy as jnp
from jax import lax
from jax.experimental import pallas as pl
from jax.experimental.pallas import tpu as pltpu


def _round_up(n, m):
    return (n + m - 1) // m * m


# ----------------------------------------------------------------------------
# Per-generation dtype dispatch (review: bf16 tanh only where EUP supports it)
# ----------------------------------------------------------------------------
def _default_dtypes():
    try:
        kind = jax.devices()[0].device_kind.lower()
    except Exception:
        return jnp.float32, jnp.float32
    bf16_ok = any(tag in kind for tag in ("v6", "v7", "7x"))
    if bf16_ok:
        return jnp.bfloat16, jnp.bfloat16     # (matmul operand dtype, activation dtype)
    return jnp.float32, jnp.float32            # v5e and older: f32 throughout


# ----------------------------------------------------------------------------
# Batch-tile selection: single tile when possible; even tile count otherwise
# ----------------------------------------------------------------------------
def _choose_batch_tiling(B, max_block_batch):
    max_tb = max(128, (max_block_batch // 128) * 128)
    tb_single = _round_up(max(B, 1), 128)
    if tb_single <= max_tb:
        return tb_single, 1                    # one grid step -> no per-step overhead
    k = 2                                      # even tile count for v7x megacore balance
    while _round_up(pl.cdiv(B, k), 128) > max_tb:
        k += 2
    tb = _round_up(pl.cdiv(B, k), 128)
    return tb, pl.cdiv(B, tb)


# ----------------------------------------------------------------------------
# Pallas kernel body: all layer matmuls + activations + sum-of-squares
# ----------------------------------------------------------------------------
def _make_lyapunov_kernel(num_layers, activations, compute_dtype, act_dtype):
    """Kernel closed over the (static) layer count / activations / dtypes."""

    def kernel(x_ref, *refs):
        # refs = (k0_ref, ..., k{L-1}_ref, out_ref)
        k_refs = refs[:num_layers]
        o_ref = refs[num_layers]

        # x block arrives batch-major (TB, d_in).  Contract its feature axis
        # directly (lhs (out0, d_in) . rhs (TB, d_in) over last dims), which
        # is the standard 'md,nd->mn' MXU form, so bulk activations are
        # feature-major (feat, TB) with batch on the 128-lane axis.
        x_blk = x_ref[...].astype(compute_dtype)                  # (TB, d_in)
        y = lax.dot_general(
            k_refs[0][...], x_blk,
            dimension_numbers=(((1,), (1,)), ((), ())),
            preferred_element_type=jnp.float32)                   # (out0, TB) f32 acc
        h = activations[0](y.astype(act_dtype))                   # bf16 tanh on v6e/v7x

        for i in range(1, num_layers):
            y = jnp.dot(k_refs[i][...], h.astype(compute_dtype),
                        preferred_element_type=jnp.float32)       # (out_i, TB) f32 acc
            h = activations[i](y.astype(act_dtype))

        # values[b] = sum_f h[f, b]^2  ->  lane-dense (1, TB) f32 store.
        hf = h.astype(jnp.float32)
        o_ref[...] = jnp.sum(hf * hf, axis=0, keepdims=True)

    return kernel


# ----------------------------------------------------------------------------
# Wrapper: batch tiling, layout plumbing, pallas_call
# ----------------------------------------------------------------------------
def lyapunov_forward(x, kernels, activations, *, max_block_batch=8192,
                     compute_dtype=None, act_dtype=None):
    """x: (B, input_dim).  kernels[i]: (out_i, in_i) f32 (module orientation)."""
    num_layers = len(kernels)
    B, d_in = x.shape

    if compute_dtype is None or act_dtype is None:
        dflt_c, dflt_a = _default_dtypes()
        compute_dtype = dflt_c if compute_dtype is None else compute_dtype
        act_dtype = dflt_a if act_dtype is None else act_dtype

    tb, num_tiles = _choose_batch_tiling(B, max_block_batch)

    # Weights: tiny one-off cast (no-op when compute_dtype == f32), then each
    # whole weight is a single block with a constant index map (VMEM-resident).
    kernels_c = [k.astype(compute_dtype) for k in kernels]

    kernel_body = _make_lyapunov_kernel(num_layers, tuple(activations),
                                        compute_dtype, act_dtype)

    in_specs = [pl.BlockSpec((tb, d_in), lambda i: (i, 0))]
    for k in kernels_c:
        in_specs.append(pl.BlockSpec(k.shape, lambda i: (0, 0)))

    w_elems = sum(int(k.shape[0]) * int(k.shape[1]) for k in kernels)
    out_dims_total = sum(int(k.shape[0]) for k in kernels)
    eff_b = num_tiles * tb
    bytes_accessed = (B * d_in * x.dtype.itemsize
                      + w_elems * jnp.dtype(compute_dtype).itemsize
                      + B * 4)

    out = pl.pallas_call(
        kernel_body,
        out_shape=jax.ShapeDtypeStruct((1, B), jnp.float32),
        grid=(num_tiles,),
        in_specs=in_specs,
        out_specs=pl.BlockSpec((1, tb), lambda i: (0, i)),
        compiler_params=pltpu.CompilerParams(
            dimension_semantics=("parallel",)),
        cost_estimate=pl.CostEstimate(
            flops=2 * eff_b * w_elems,
            transcendentals=eff_b * out_dims_total,
            bytes_accessed=bytes_accessed),
    )(x, *kernels_c)

    return out[0]                                              # (B,)


# ----------------------------------------------------------------------------
# Parameter construction (glue, mirrors LyapunovNN.__init__ / update_kernel)
# ----------------------------------------------------------------------------
def build_lyapunov_params(key, input_dim, layer_dims, eps=1e-6):
    layer_dims = list(layer_dims)
    num_layers = len(layer_dims)
    assert layer_dims[0] >= input_dim
    assert all(np.diff(layer_dims) >= 0)

    kernels = []
    for i in range(num_layers):
        layer_input_dim = input_dim if i == 0 else layer_dims[i - 1]
        hidden_dim = int(math.ceil((layer_input_dim + 1) / 2))

        # torch.nn.Linear default init: U(-1/sqrt(fan_in), 1/sqrt(fan_in))
        key, k1, k2 = jax.random.split(key, 3)
        bound = 1.0 / math.sqrt(layer_input_dim)
        W = jax.random.uniform(
            k1, (hidden_dim, layer_input_dim), jnp.float32, -bound, bound)

        # kernel = W.T @ W + eps * I  (positive definite square block)
        kern = W.T @ W + eps * jnp.eye(layer_input_dim, dtype=jnp.float32)

        dim_diff = layer_dims[i] - layer_input_dim
        if dim_diff > 0:
            W_extra = jax.random.uniform(
                k2, (dim_diff, layer_input_dim), jnp.float32, -bound, bound)
            kern = jnp.concatenate([kern, W_extra], axis=0)

        kernels.append(kern)          # (out_i, in_i) — module orientation
    # TODO(synk): update_kernel's eigenvalue-positivity assert (np.linalg.eig)
    # is a host-side check, not part of the forward pass / kernel.
    return kernels


# ----------------------------------------------------------------------------
# Pure-JAX reference (module semantics) for verification
# ----------------------------------------------------------------------------
def lyapunov_forward_ref(x, kernels, activations):
    h = x
    for k, act in zip(kernels, activations):
        h = act(h @ k.T)
    return jnp.sum(h * h, axis=1)


if __name__ == "__main__":
    # Module-consistent config: input_dim=4, layer_dims=[32, 64, 64], tanh.
    input_dim = 4
    layer_dims = [32, 64, 64]
    activations = [jnp.tanh, jnp.tanh, jnp.tanh]
    batch = 300          # not a multiple of 128 -> exercises the partial block

    key = jax.random.PRNGKey(0)
    key, kx = jax.random.split(key)
    x = jax.random.normal(kx, (batch, input_dim), dtype=jnp.float32)
    kernels = build_lyapunov_params(key, input_dim, layer_dims, eps=1e-6)

    ref = lyapunov_forward_ref(x, kernels, activations)

    # Exact-precision path, single tile (grid=(1,)): tight semantic check.
    out_f32 = lyapunov_forward(x, kernels, activations,
                               compute_dtype=jnp.float32, act_dtype=jnp.float32)
    out_f32 = jax.block_until_ready(out_f32)
    assert out_f32.shape == (batch,)
    np.testing.assert_allclose(np.asarray(out_f32), np.asarray(ref),
                               rtol=1e-4, atol=1e-5)

    # Exact-precision path, forced multi-step grid (exercises batch tiling).
    out_tiled = lyapunov_forward(x, kernels, activations, max_block_batch=128,
                                 compute_dtype=jnp.float32, act_dtype=jnp.float32)
    out_tiled = jax.block_until_ready(out_tiled)
    np.testing.assert_allclose(np.asarray(out_tiled), np.asarray(ref),
                               rtol=1e-4, atol=1e-5)

    # Fast path with per-generation auto dtype (bf16 operands + bf16 tanh on
    # v6e/v7x, pure f32 on v5e and older): loose check when bf16 is in play.
    auto_c, _ = _default_dtypes()
    out_fast = lyapunov_forward(x, kernels, activations)
    out_fast = jax.block_until_ready(out_fast)
    assert out_fast.shape == (batch,)
    if auto_c == jnp.bfloat16:
        np.testing.assert_allclose(np.asarray(out_fast), np.asarray(ref),
                                   rtol=1e-1, atol=2e-2)
    else:
        np.testing.assert_allclose(np.asarray(out_fast), np.asarray(ref),
                                   rtol=1e-4, atol=1e-5)

    print("KERNEL_OK")
</pallas_src>

<mosaic_0001>
module attributes {stable_mosaic.version = 11 : i64} {
  func.func @kernel(%arg0: i32, %arg1: memref<384x4xf32, #tpu.memory_space<vmem>>, %arg2: memref<32x4xf32, #tpu.memory_space<vmem>>, %arg3: memref<64x32xf32, #tpu.memory_space<vmem>>, %arg4: memref<64x64xf32, #tpu.memory_space<vmem>>, %arg5: memref<1x384xf32, #tpu.memory_space<vmem>>) attributes {dimension_semantics = [#tpu.dimension_semantics<parallel>], iteration_bounds = array<i64: 1>, scalar_prefetch = 0 : i64, scratch_operands = 0 : i64, tpu.core_type = #tpu.core_type<tc>, window_params = [{transform_indices = @transform_0, window_bounds = array<i64: 384, 4>}, {pipeline_mode = #tpu.pipeline_mode<synchronous>, transform_indices = @transform_1, window_bounds = array<i64: 32, 4>}, {pipeline_mode = #tpu.pipeline_mode<synchronous>, transform_indices = @transform_2, window_bounds = array<i64: 64, 32>}, {pipeline_mode = #tpu.pipeline_mode<synchronous>, transform_indices = @transform_3, window_bounds = array<i64: 64, 64>}, {transform_indices = @transform_4, window_bounds = array<i64: 1, 384>}]} {
    %c0 = arith.constant 0 : index
    %c0_0 = arith.constant 0 : index
    %0 = vector.load %arg1[%c0, %c0_0] : memref<384x4xf32, #tpu.memory_space<vmem>>, vector<384x4xf32>
    %c0_1 = arith.constant 0 : index
    %c0_2 = arith.constant 0 : index
    %1 = vector.load %arg2[%c0_1, %c0_2] : memref<32x4xf32, #tpu.memory_space<vmem>>, vector<32x4xf32>
    %cst = arith.constant dense<0.000000e+00> : vector<32x384xf32>
    %2 = tpu.matmul %1, %0, %cst {dimension_numbers = #tpu.dot_dimension_numbers<[1], [1], [0], [0], [0, 0, 1, 0], [], []>} : vector<32x4xf32>, vector<384x4xf32>, vector<32x384xf32> -> vector<32x384xf32>
    %3 = math.tanh %2 : vector<32x384xf32>
    %c0_3 = arith.constant 0 : index
    %c0_4 = arith.constant 0 : index
    %4 = vector.load %arg3[%c0_3, %c0_4] : memref<64x32xf32, #tpu.memory_space<vmem>>, vector<64x32xf32>
    %cst_5 = arith.constant dense<0.000000e+00> : vector<64x384xf32>
    %5 = tpu.matmul %4, %3, %cst_5 {dimension_numbers = #tpu.dot_dimension_numbers<[1], [0], [0], [1], [0, 0, 1, 1], [], []>} : vector<64x32xf32>, vector<32x384xf32>, vector<64x384xf32> -> vector<64x384xf32>
    %6 = math.tanh %5 : vector<64x384xf32>
    %c0_6 = arith.constant 0 : index
    %c0_7 = arith.constant 0 : index
    %7 = vector.load %arg4[%c0_6, %c0_7] : memref<64x64xf32, #tpu.memory_space<vmem>>, vector<64x64xf32>
    %cst_8 = arith.constant dense<0.000000e+00> : vector<64x384xf32>
    %8 = tpu.matmul %7, %6, %cst_8 {dimension_numbers = #tpu.dot_dimension_numbers<[1], [0], [0], [1], [0, 0, 1, 1], [], []>} : vector<64x64xf32>, vector<64x384xf32>, vector<64x384xf32> -> vector<64x384xf32>
    %9 = math.tanh %8 : vector<64x384xf32>
    %10 = arith.mulf %9, %9 : vector<64x384xf32>
    %cst_9 = arith.constant dense<0.000000e+00> : vector<384xf32>
    %11 = vector.multi_reduction <add>, %10, %cst_9 [0] : vector<64x384xf32> to vector<384xf32>
    %12 = vector.shape_cast %11 : vector<384xf32> to vector<1x384xf32>
    %c0_10 = arith.constant 0 : index
    %c0_11 = arith.constant 0 : index
    %13 = vector.load %arg5[%c0_10, %c0_11] : memref<1x384xf32, #tpu.memory_space<vmem>>, vector<1x384xf32>
    tpu.vector_store %arg5[%c0_10, %c0_11], %12 {strides = array<i32>} : memref<1x384xf32, #tpu.memory_space<vmem>>, vector<1x384xf32>,
    return
  }
  func.func @transform_0(%arg0: i32) -> (i32, i32) {
    %c0_i32 = arith.constant 0 : i32
    %c0_i32_0 = arith.constant 0 : i32
    return %arg0, %c0_i32 : i32, i32
  }
  func.func @transform_1(%arg0: i32) -> (i32, i32) {
    %c0_i32 = arith.constant 0 : i32
    %c0_i32_0 = arith.constant 0 : i32
    %c0_i32_1 = arith.constant 0 : i32
    return %c0_i32, %c0_i32_0 : i32, i32
  }
  func.func @transform_2(%arg0: i32) -> (i32, i32) {
    %c0_i32 = arith.constant 0 : i32
    %c0_i32_0 = arith.constant 0 : i32
    %c0_i32_1 = arith.constant 0 : i32
    return %c0_i32, %c0_i32_0 : i32, i32
  }
  func.func @transform_3(%arg0: i32) -> (i32, i32) {
    %c0_i32 = arith.constant 0 : i32
    %c0_i32_0 = arith.constant 0 : i32
    %c0_i32_1 = arith.constant 0 : i32
    return %c0_i32, %c0_i32_0 : i32, i32
  }
  func.func @transform_4(%arg0: i32) -> (i32, i32) {
    %c0_i32 = arith.constant 0 : i32
    %c0_i32_0 = arith.constant 0 : i32
    return %c0_i32, %arg0 : i32, i32
  }
}

</mosaic_0001>

<llo_original>
// kernel: tpu_custom_call.1
$region0: #{tpu_custom_call.1}
  #allocation0 [shape = 'u32[]', space=smem, size = 0x4, offset = 0x4, fixed_abs, tag = 'smem constant byte address 0x4 - core index']
  #allocation1 [shape = 'u32[144,128]{1,0:T(1,128)}', space=vmem, size = 0x12000, scoped, tag = 'internal scratch']
  %s0 = inlined_call_operand.vmem [shape: f32[300,4], index: 0, kind: input, shape index: {}]
  %s1 = inlined_call_operand.vmem [shape: f32[32,4], index: 1, kind: input, shape index: {}]
  %s2 = inlined_call_operand.vmem [shape: f32[64,32], index: 2, kind: input, shape index: {}]
  %s3 = inlined_call_operand.vmem [shape: f32[64,64], index: 3, kind: input, shape index: {}]
  %s4 = inlined_call_operand.hbm [shape: f32[1,300], index: 4, kind: output, shape index: {}]
  %s5 = sld [smem:[#allocation0]]
  $region26: #{tpu_custom_call.1} parent=0
    _
  %s7 = ssub.s32 1, %s5
  %s8 = scalar_select 0, %s7, %s5
  $region1: #{tpu_custom_call.1} parent=0
    #allocation2 [shape = 'u8[1536]{0}', space=vmem, size = 0x800, scoped, tag = 'output window, operand 0, single buffered']
    #allocation3 [shape = 's32[1]{0}', space=sflag, size = 0x4, scoped, tag = 'scoped memory for tpu_custom_call.1']
    %9 = vsyncpa [#allocation3], 0
    // Predicated region
    $region2: #{tpu_custom_call.1} parent=1 // pred_check
      _
    $region3: #{tpu_custom_call.1} parent=1 // pred_check_branch
      %11 = sbr.rel (0) target = $region5
    $region4: #{tpu_custom_call.1} parent=1 // pred_region
      _
    $region5: #{tpu_custom_call.1} parent=1 // pred_fallthru
      _
    // Predicated region
    $region6: #{tpu_custom_call.1} parent=1 // pred_check
      _
    $region7: #{tpu_custom_call.1} parent=1 // pred_check_branch
      %13 = sbr.rel (0) target = $region9
    $region8: #{tpu_custom_call.1} parent=1 // pred_region
      _
    $region9: #{tpu_custom_call.1} parent=1 // pred_fallthru
      _
    // Predicated region
    $region10: #{tpu_custom_call.1} parent=1 // pred_check
      _
    $region11: #{tpu_custom_call.1} parent=1 // pred_check_branch
      %15 = sbr.rel (0) target = $region13
    $region12: #{tpu_custom_call.1} parent=1 // pred_region
      _
    $region13: #{tpu_custom_call.1} parent=1 // pred_fallthru
      _
    // Predicated region
    $region14: #{tpu_custom_call.1} parent=1 // pred_check
      _
    $region15: #{tpu_custom_call.1} parent=1 // pred_check_branch
      %17 = sbr.rel (0) target = $region17
    $region16: #{tpu_custom_call.1} parent=1 // pred_region
      _
    $region17: #{tpu_custom_call.1} parent=1 // pred_fallthru
      _
    %v18 = vld [vmem:[%s0] sm:$0xff]
    %v19 = vld [vmem:[%s0 + $0x8] sm:$0xff]
    %v20 = vld [vmem:[%s0 + $0x10] sm:$0xff]
    %v21 = vld [vmem:[%s0 + $0x18] sm:$0xff]
    %v22 = vld [vmem:[%s0 + $0x20] sm:$0xff]
    %v23 = vld [vmem:[%s0 + $0x28] sm:$0xff]
    %v24 = vld [vmem:[%s0 + $0x30] sm:$0xff]
    %v25 = vld [vmem:[%s0 + $0x38] sm:$0xff]
    %v26 = vld [vmem:[%s0 + $0x40] sm:$0xff]
    %v27 = vld [vmem:[%s0 + $0x48] sm:$0xff]
    %v28 = vld [vmem:[%s0 + $0x50] sm:$0xff]
    %v29 = vld [vmem:[%s0 + $0x58] sm:$0xff]
    %v30 = vld [vmem:[%s0 + $0x60] sm:$0xff]
    %v31 = vld [vmem:[%s0 + $0x68] sm:$0xff]
    %v32 = vld [vmem:[%s0 + $0x70] sm:$0xff]
    %v33 = vld [vmem:[%s0 + $0x78] sm:$0xff]
    %v34 = vld [vmem:[%s0 + $0x80] sm:$0xff]
    %v35 = vld [vmem:[%s0 + $0x88] sm:$0xff]
    %v36 = vld [vmem:[%s0 + $0x90] sm:$0xff]
    %v37 = vld [vmem:[%s0 + $0x98] sm:$0xff]
    %v38 = vld [vmem:[%s0 + $0xa0] sm:$0xff]
    %v39 = vld [vmem:[%s0 + $0xa8] sm:$0xff]
    %v40 = vld [vmem:[%s0 + $0xb0] sm:$0xff]
    %v41 = vld [vmem:[%s0 + $0xb8] sm:$0xff]
    %v42 = vld [vmem:[%s0 + $0xc0] sm:$0xff]
    %v43 = vld [vmem:[%s0 + $0xc8] sm:$0xff]
    %v44 = vld [vmem:[%s0 + $0xd0] sm:$0xff]
    %v45 = vld [vmem:[%s0 + $0xd8] sm:$0xff]
    %v46 = vld [vmem:[%s0 + $0xe0] sm:$0xff]
    %v47 = vld [vmem:[%s0 + $0xe8] sm:$0xff]
    %v48 = vld [vmem:[%s0 + $0xf0] sm:$0xff]
    %v49 = vld [vmem:[%s0 + $0xf8] sm:$0xff]
    %v50 = vld [vmem:[%s0 + $0x100] sm:$0xff]
    %v51 = vld [vmem:[%s0 + $0x108] sm:$0xff]
    %v52 = vld [vmem:[%s0 + $0x110] sm:$0xff]
    %v53 = vld [vmem:[%s0 + $0x118] sm:$0xff]
    %v54 = vld [vmem:[%s0 + $0x120] sm:$0xff]
    %v55 = vld [vmem:[%s0 + $0x128] sm:$0xff]
    %v56 = vld [vmem:[%s0 + $0x130] sm:$0xff]
    %v57 = vld [vmem:[%s0 + $0x138] sm:$0xff]
    %v58 = vld [vmem:[%s0 + $0x140] sm:$0xff]
    %v59 = vld [vmem:[%s0 + $0x148] sm:$0xff]
    %v60 = vld [vmem:[%s0 + $0x150] sm:$0xff]
    %v61 = vld [vmem:[%s0 + $0x158] sm:$0xff]
    %v62 = vld [vmem:[%s0 + $0x160] sm:$0xff]
    %v63 = vld [vmem:[%s0 + $0x168] sm:$0xff]
    %v64 = vld [vmem:[%s0 + $0x170] sm:$0xff]
    %v65 = vld [vmem:[%s0 + $0x178] sm:$0xff]
    %v66 = vld [vmem:[%s1] sm:$0xff]
    %v67 = vld [vmem:[%s1 + $0x8] sm:$0xff]
    %v68 = vld [vmem:[%s1 + $0x10] sm:$0xff]
    %v69 = vld [vmem:[%s1 + $0x18] sm:$0xff]
    %vm70 = vcmask 31744
    %v72 = vsel %vm70, %v66, 0
    %v75 = vsel %vm70, %v67, 0
    %v78 = vsel %vm70, %v68, 0
    %v81 = vsel %vm70, %v69, 0
    %v84 = vsel %vm70, %v18, 0
    %v87 = vsel %vm70, %v19, 0
    %v90 = vsel %vm70, %v20, 0
    %v93 = vsel %vm70, %v21, 0
    %v96 = vsel %vm70, %v22, 0
    %v99 = vsel %vm70, %v23, 0
    %v102 = vsel %vm70, %v24, 0
    %v105 = vsel %vm70, %v25, 0
    %v108 = vsel %vm70, %v26, 0
    %v111 = vsel %vm70, %v27, 0
    %v114 = vsel %vm70, %v28, 0
    %v117 = vsel %vm70, %v29, 0
    %v120 = vsel %vm70, %v30, 0
    %v123 = vsel %vm70, %v31, 0
    %v126 = vsel %vm70, %v32, 0
    %v129 = vsel %vm70, %v33, 0
    %v132 = vsel %vm70, %v34, 0
    %v135 = vsel %vm70, %v35, 0
    %v138 = vsel %vm70, %v36, 0
    %v141 = vsel %vm70, %v37, 0
    %v144 = vsel %vm70, %v38, 0
    %v147 = vsel %vm70, %v39, 0
    %v150 = vsel %vm70, %v40, 0
    %v153 = vsel %vm70, %v41, 0
    %v156 = vsel %vm70, %v42, 0
    %v159 = vsel %vm70, %v43, 0
    %v162 = vsel %vm70, %v44, 0
    %v165 = vsel %vm70, %v45, 0
    %v168 = vsel %vm70, %v46, 0
    %v171 = vsel %vm70, %v47, 0
    %v174 = vsel %vm70, %v48, 0
    %v177 = vsel %vm70, %v49, 0
    %v180 = vsel %vm70, %v50, 0
    %v183 = vsel %vm70, %v51, 0
    %v186 = vsel %vm70, %v52, 0
    %v189 = vsel %vm70, %v53, 0
    %v192 = vsel %vm70, %v54, 0
    %v195 = vsel %vm70, %v55, 0
    %v198 = vsel %vm70, %v56, 0
    %v201 = vsel %vm70, %v57, 0
    %v204 = vsel %vm70, %v58, 0
    %v207 = vsel %vm70, %v59, 0
    %v210 = vsel %vm70, %v60, 0
    %v213 = vsel %vm70, %v61, 0
    %v216 = vsel %vm70, %v62, 0
    %v219 = vsel %vm70, %v63, 0
    %v222 = vsel %vm70, %v64, 0
    %v225 = vsel %vm70, %v65, 0
    %227 = vmatprep.subr.mxu0 0.0
    %228 = vmatpush1.xpose.msra.mxu0 %v84
    %229 = vmatprep.subr.mxu0 0.0
    %230 = vmatpush1.xpose.msra.mxu0 %v87
    %231 = vmatprep.subr.mxu0 0.0
    %232 = vmatpush1.xpose.msra.mxu0 %v90
    %233 = vmatprep.subr.mxu0 0.0
    %234 = vmatpush1.xpose.msra.mxu0 %v93
    %235 = vmatprep.subr.mxu0 0.0
    %236 = vmatpush1.xpose.msra.mxu0 %v96
    %237 = vmatprep.subr.mxu0 0.0
    %238 = vmatpush1.xpose.msra.mxu0 %v99
    %239 = vmatprep.subr.mxu0 0.0
    %240 = vmatpush1.xpose.msra.mxu0 %v102
    %241 = vmatprep.subr.mxu0 0.0
    %242 = vmatpush1.xpose.msra.mxu0 %v105
    %243 = vmatprep.subr.mxu0 0.0
    %244 = vmatpush1.xpose.msra.mxu0 %v108
    %245 = vmatprep.subr.mxu0 0.0
    %246 = vmatpush1.xpose.msra.mxu0 %v111
    %247 = vmatprep.subr.mxu0 0.0
    %248 = vmatpush1.xpose.msra.mxu0 %v114
    %249 = vmatprep.subr.mxu0 0.0
    %250 = vmatpush1.xpose.msra.mxu0 %v117
    %251 = vmatprep.subr.mxu0 0.0
    %252 = vmatpush1.xpose.msra.mxu0 %v120
    %253 = vmatprep.subr.mxu0 0.0
    %254 = vmatpush1.xpose.msra.mxu0 %v123
    %255 = vmatprep.subr.mxu0 0.0
    %256 = vmatpush1.xpose.msra.mxu0 %v126
    %257 = vmatprep.subr.mxu0 0.0
    %258 = vmatpush1.xpose.msra.mxu0 %v129
    %259 = vmatprep.subr.mxu0 0.0
    %260 = vmatpush1.xpose.msra.mxu0 %v132
    %261 = vmatprep.subr.mxu0 0.0
    %262 = vmatpush1.xpose.msra.mxu0 %v135
    %263 = vmatprep.subr.mxu0 0.0
    %264 = vmatpush1.xpose.msra.mxu0 %v138
    %265 = vmatprep.subr.mxu0 0.0
    %266 = vmatpush1.xpose.msra.mxu0 %v141
    %267 = vmatprep.subr.mxu0 0.0
    %268 = vmatpush1.xpose.msra.mxu0 %v144
    %269 = vmatprep.subr.mxu0 0.0
    %270 = vmatpush1.xpose.msra.mxu0 %v147
    %271 = vmatprep.subr.mxu0 0.0
    %272 = vmatpush1.xpose.msra.mxu0 %v150
    %273 = vmatprep.subr.mxu0 0.0
    %274 = vmatpush1.xpose.msra.mxu0 %v153
    %275 = vmatprep.subr.mxu0 0.0
    %276 = vmatpush1.xpose.msra.mxu0 %v156
    %277 = vmatprep.subr.mxu0 0.0
    %278 = vmatpush1.xpose.msra.mxu0 %v159
    %279 = vmatprep.subr.mxu0 0.0
    %280 = vmatpush1.xpose.msra.mxu0 %v162
    %281 = vmatprep.subr.mxu0 0.0
    %282 = vmatpush1.xpose.msra.mxu0 %v165
    %283 = vmatprep.subr.mxu0 0.0
    %284 = vmatpush1.xpose.msra.mxu0 %v168
    %285 = vmatprep.subr.mxu0 0.0
    %286 = vmatpush1.xpose.msra.mxu0 %v171
    %287 = vmatprep.subr.mxu0 0.0
    %288 = vmatpush1.xpose.msra.mxu0 %v174
    %289 = vmatprep.subr.mxu0 0.0
    %290 = vmatpush1.xpose.msra.mxu0 %v177
    %291 = vmatprep.mubr.f32.mxu0 0.0
    %292 = vmatmul.mubr.f32.gmra.mrb[0].mxu0 %v72
    %v293 = vpop.f32.mrb[0].mxu0
    %v294 = vadd.f32 0.0, %v293
    %v295 = vpop.f32.mrb[0].mxu0
    %v296 = vadd.f32 0.0, %v295
    %297 = vmatprep.mubr.f32.mxu0 0.0
    %298 = vmatmul.mubr.f32.gmra.mrb[0].mxu0 %v75
    %v299 = vpop.f32.mrb[0].mxu0
    %v300 = vadd.f32 0.0, %v299
    %v301 = vpop.f32.mrb[0].mxu0
    %v302 = vadd.f32 0.0, %v301
    %303 = vmatprep.mubr.f32.mxu0 0.0
    %304 = vmatmul.mubr.f32.gmra.mrb[0].mxu0 %v78
    %v305 = vpop.f32.mrb[0].mxu0
    %v306 = vadd.f32 0.0, %v305
    %v307 = vpop.f32.mrb[0].mxu0
    %v308 = vadd.f32 0.0, %v307
    %309 = vmatprep.mubr.f32.mxu0 0.0
    %310 = vmatmul.mubr.f32.gmra.mrb[0].mxu0 %v81
    %v311 = vpop.f32.mrb[0].mxu0
    %v312 = vadd.f32 0.0, %v311
    %v313 = vpop.f32.mrb[0].mxu0
    %v314 = vadd.f32 0.0, %v313
    %315 = vdwg.mxu0
    %316 = vmatprep.subr.mxu0 0.0
    %317 = vmatpush1.xpose.msra.mxu0 %v180
    %318 = vmatprep.subr.mxu0 0.0
    %319 = vmatpush1.xpose.msra.mxu0 %v183
    %320 = vmatprep.subr.mxu0 0.0
    %321 = vmatpush1.xpose.msra.mxu0 %v186
    %322 = vmatprep.subr.mxu0 0.0
    %323 = vmatpush1.xpose.msra.mxu0 %v189
    %324 = vmatprep.subr.mxu0 0.0
    %325 = vmatpush1.xpose.msra.mxu0 %v192
    %326 = vmatprep.subr.mxu0 0.0
    %327 = vmatpush1.xpose.msra.mxu0 %v195
    %328 = vmatprep.subr.mxu0 0.0
    %329 = vmatpush1.xpose.msra.mxu0 %v198
    %330 = vmatprep.subr.mxu0 0.0
    %331 = vmatpush1.xpose.msra.mxu0 %v201
    %332 = vmatprep.subr.mxu0 0.0
    %333 = vmatpush1.xpose.msra.mxu0 %v204
    %334 = vmatprep.subr.mxu0 0.0
    %335 = vmatpush1.xpose.msra.mxu0 %v207
    %336 = vmatprep.subr.mxu0 0.0
    %337 = vmatpush1.xpose.msra.mxu0 %v210
    %338 = vmatprep.subr.mxu0 0.0
    %339 = vmatpush1.xpose.msra.mxu0 %v213
    %340 = vmatprep.subr.mxu0 0.0
    %341 = vmatpush1.xpose.msra.mxu0 %v216
    %342 = vmatprep.subr.mxu0 0.0
    %343 = vmatpush1.xpose.msra.mxu0 %v219
    %344 = vmatprep.subr.mxu0 0.0
    %345 = vmatpush1.xpose.msra.mxu0 %v222
    %346 = vmatprep.subr.mxu0 0.0
    %347 = vmatpush1.xpose.msra.mxu0 %v225
    %348 = vmatprep.subr.mxu0 0.0
    %349 = vmatpush1.xpose.msra.mxu0 0.0
    %350 = vmatprep.subr.mxu0 0.0
    %351 = vmatpush1.xpose.msra.mxu0 0.0
    %352 = vmatprep.subr.mxu0 0.0
    %353 = vmatpush1.xpose.msra.mxu0 0.0
    %354 = vmatprep.subr.mxu0 0.0
    %355 = vmatpush1.xpose.msra.mxu0 0.0
    %356 = vmatprep.subr.mxu0 0.0
    %357 = vmatpush1.xpose.msra.mxu0 0.0
    %358 = vmatprep.subr.mxu0 0.0
    %359 = vmatpush1.xpose.msra.mxu0 0.0
    %360 = vmatprep.subr.mxu0 0.0
    %361 = vmatpush1.xpose.msra.mxu0 0.0
    %362 = vmatprep.subr.mxu0 0.0
    %363 = vmatpush1.xpose.msra.mxu0 0.0
    %364 = vmatprep.subr.mxu0 0.0
    %365 = vmatpush1.xpose.msra.mxu0 0.0
    %366 = vmatprep.subr.mxu0 0.0
    %367 = vmatpush1.xpose.msra.mxu0 0.0
    %368 = vmatprep.subr.mxu0 0.0
    %369 = vmatpush1.xpose.msra.mxu0 0.0
    %370 = vmatprep.subr.mxu0 0.0
    %371 = vmatpush1.xpose.msra.mxu0 0.0
    %372 = vmatprep.subr.mxu0 0.0
    %373 = vmatpush1.xpose.msra.mxu0 0.0
    %374 = vmatprep.subr.mxu0 0.0
    %375 = vmatpush1.xpose.msra.mxu0 0.0
    %376 = vmatprep.subr.mxu0 0.0
    %377 = vmatpush1.xpose.msra.mxu0 0.0
    %378 = vmatprep.subr.mxu0 0.0
    %379 = vmatpush1.xpose.msra.mxu0 0.0
    %380 = vmatprep.mubr.f32.mxu0 0.0
    %381 = vmatmul.mubr.f32.gmra.mrb[0].mxu0 %v72
    %v382 = vpop.f32.mrb[0].mxu0
    %v383 = vadd.f32 0.0, %v382
    %v384 = vpop.f32.mrb[0].mxu0
    %385 = vmatprep.mubr.f32.mxu0 0.0
    %386 = vmatmul.mubr.f32.gmra.mrb[0].mxu0 %v75
    %v387 = vpop.f32.mrb[0].mxu0
    %v388 = vadd.f32 0.0, %v387
    %v389 = vpop.f32.mrb[0].mxu0
    %390 = vmatprep.mubr.f32.mxu0 0.0
    %391 = vmatmul.mubr.f32.gmra.mrb[0].mxu0 %v78
    %v392 = vpop.f32.mrb[0].mxu0
    %v393 = vadd.f32 0.0, %v392
    %v394 = vpop.f32.mrb[0].mxu0
    %395 = vmatprep.mubr.f32.mxu0 0.0
    %396 = vmatmul.mubr.f32.gmra.mrb[0].mxu0 %v81
    %v397 = vpop.f32.mrb[0].mxu0
    %v398 = vadd.f32 0.0, %v397
    %v399 = vpop.f32.mrb[0].mxu0
    %400 = vdwg.mxu0
    %v401 = vtanh.pop %v294
    %v402 = vtanh.pop %v296
    %v403 = vtanh.pop %v383
    %v404 = vtanh.pop %v300
    %v405 = vtanh.pop %v302
    %v406 = vtanh.pop %v388
    %v407 = vtanh.pop %v306
    %v408 = vtanh.pop %v308
    %v409 = vtanh.pop %v393
    %v410 = vtanh.pop %v312
    %v411 = vtanh.pop %v314
    %v412 = vtanh.pop %v398
    %v413 = vld [vmem:[%s2] sm:$0xff]
    %v414 = vld [vmem:[%s2 + $0x8] sm:$0xff]
    %v415 = vld [vmem:[%s2 + $0x10] sm:$0xff]
    %v416 = vld [vmem:[%s2 + $0x18] sm:$0xff]
    %v417 = vld [vmem:[%s2 + $0x20] sm:$0xff]
    %v418 = vld [vmem:[%s2 + $0x28] sm:$0xff]
    %v419 = vld [vmem:[%s2 + $0x30] sm:$0xff]
    %v420 = vld [vmem:[%s2 + $0x38] sm:$0xff]
    %vm421 = vcmask 261120
    %v423 = vsel %vm421, %v413, 0
    %v426 = vsel %vm421, %v414, 0
    %v429 = vsel %vm421, %v415, 0
    %v432 = vsel %vm421, %v416, 0
    %v435 = vsel %vm421, %v417, 0
    %v438 = vsel %vm421, %v418, 0
    %v441 = vsel %vm421, %v419, 0
    %v444 = vsel %vm421, %v420, 0
    %446 = vmatprep.subr.mxu0 %v402
    %447 = vmatpush1.msra.mxu0 %v401
    %448 = vmatprep.subr.mxu0 %v405
    %449 = vmatpush1.msra.mxu0 %v404
    %450 = vmatprep.subr.mxu0 %v408
    %451 = vmatpush1.msra.mxu0 %v407
    %452 = vmatprep.subr.mxu0 %v411
    %453 = vmatpush1.msra.mxu0 %v410
    %454 = vmatprep.subr.mxu0 0.0
    %455 = vmatpush1.msra.mxu0 0.0
    %456 = vmatprep.subr.mxu0 0.0
    %457 = vmatpush1.msra.mxu0 0.0
    %458 = vmatprep.subr.mxu0 0.0
    %459 = vmatpush1.msra.mxu0 0.0
    %460 = vmatprep.subr.mxu0 0.0
    %461 = vmatpush1.msra.mxu0 0.0
    %462 = vmatprep.subr.mxu0 0.0
    %463 = vmatpush1.msra.mxu0 0.0
    %464 = vmatprep.subr.mxu0 0.0
    %465 = vmatpush1.msra.mxu0 0.0
    %466 = vmatprep.subr.mxu0 0.0
    %467 = vmatpush1.msra.mxu0 0.0
    %468 = vmatprep.subr.mxu0 0.0
    %469 = vmatpush1.msra.mxu0 0.0
    %470 = vmatprep.subr.mxu0 0.0
    %471 = vmatpush1.msra.mxu0 0.0
    %472 = vmatprep.subr.mxu0 0.0
    %473 = vmatpush1.msra.mxu0 0.0
    %474 = vmatprep.subr.mxu0 0.0
    %475 = vmatpush1.msra.mxu0 0.0
    %476 = vmatprep.subr.mxu0 0.0
    %477 = vmatpush1.msra.mxu0 0.0
    %478 = vmatprep.subr.mxu0 0.0
    %479 = vmatpush1.msra.mxu0 0.0
    %480 = vmatprep.subr.mxu0 0.0
    %481 = vmatpush1.msra.mxu0 0.0
    %482 = vmatprep.subr.mxu0 0.0
    %483 = vmatpush1.msra.mxu0 0.0
    %484 = vmatprep.subr.mxu0 0.0
    %485 = vmatpush1.msra.mxu0 0.0
    %486 = vmatprep.subr.mxu0 0.0
    %487 = vmatpush1.msra.mxu0 0.0
    %488 = vmatprep.subr.mxu0 0.0
    %489 = vmatpush1.msra.mxu0 0.0
    %490 = vmatprep.subr.mxu0 0.0
    %491 = vmatpush1.msra.mxu0 0.0
    %492 = vmatprep.subr.mxu0 0.0
    %493 = vmatpush1.msra.mxu0 0.0
    %494 = vmatprep.subr.mxu0 0.0
    %495 = vmatpush1.msra.mxu0 0.0
    %496 = vmatprep.subr.mxu0 0.0
    %497 = vmatpush1.msra.mxu0 0.0
    %498 = vmatprep.subr.mxu0 0.0
    %499 = vmatpush1.msra.mxu0 0.0
    %500 = vmatprep.subr.mxu0 0.0
    %501 = vmatpush1.msra.mxu0 0.0
    %502 = vmatprep.subr.mxu0 0.0
    %503 = vmatpush1.msra.mxu0 0.0
    %504 = vmatprep.subr.mxu0 0.0
    %505 = vmatpush1.msra.mxu0 0.0
    %506 = vmatprep.subr.mxu0 0.0
    %507 = vmatpush1.msra.mxu0 0.0
    %508 = vmatprep.subr.mxu0 0.0
    %509 = vmatpush1.msra.mxu0 0.0
    %510 = vmatprep.mubr.f32.mxu0 0.0
    %511 = vmatmul.mubr.f32.gmra.mrb[0].mxu0 %v423
    %v512 = vpop.f32.mrb[0].mxu0
    %v513 = vadd.f32 0.0, %v512
    %v514 = vpop.f32.mrb[0].mxu0
    %v515 = vadd.f32 0.0, %v514
    %516 = vmatprep.mubr.f32.mxu0 0.0
    %517 = vmatmul.mubr.f32.gmra.mrb[0].mxu0 %v426
    %v518 = vpop.f32.mrb[0].mxu0
    %v519 = vadd.f32 0.0, %v518
    %v520 = vpop.f32.mrb[0].mxu0
    %v521 = vadd.f32 0.0, %v520
    %522 = vmatprep.mubr.f32.mxu0 0.0
    %523 = vmatmul.mubr.f32.gmra.mrb[0].mxu0 %v429
    %v524 = vpop.f32.mrb[0].mxu0
    %v525 = vadd.f32 0.0, %v524
    %v526 = vpop.f32.mrb[0].mxu0
    %v527 = vadd.f32 0.0, %v526
    %528 = vmatprep.mubr.f32.mxu0 0.0
    %529 = vmatmul.mubr.f32.gmra.mrb[0].mxu0 %v432
    %v530 = vpop.f32.mrb[0].mxu0
    %v531 = vadd.f32 0.0, %v530
    %v532 = vpop.f32.mrb[0].mxu0
    %v533 = vadd.f32 0.0, %v532
    %534 = vmatprep.mubr.f32.mxu0 0.0
    %535 = vmatmul.mubr.f32.gmra.mrb[0].mxu0 %v435
    %v536 = vpop.f32.mrb[0].mxu0
    %v537 = vadd.f32 0.0, %v536
    %v538 = vpop.f32.mrb[0].mxu0
    %v539 = vadd.f32 0.0, %v538
    %540 = vmatprep.mubr.f32.mxu0 0.0
    %541 = vmatmul.mubr.f32.gmra.mrb[0].mxu0 %v438
    %v542 = vpop.f32.mrb[0].mxu0
    %v543 = vadd.f32 0.0, %v542
    %v544 = vpop.f32.mrb[0].mxu0
    %v545 = vadd.f32 0.0, %v544
    %546 = vmatprep.mubr.f32.mxu0 0.0
    %547 = vmatmul.mubr.f32.gmra.mrb[0].mxu0 %v441
    %v548 = vpop.f32.mrb[0].mxu0
    %v549 = vadd.f32 0.0, %v548
    %v550 = vpop.f32.mrb[0].mxu0
    %v551 = vadd.f32 0.0, %v550
    %552 = vmatprep.mubr.f32.mxu0 0.0
    %553 = vmatmul.mubr.f32.gmra.mrb[0].mxu0 %v444
    %v554 = vpop.f32.mrb[0].mxu0
    %v555 = vadd.f32 0.0, %v554
    %v556 = vpop.f32.mrb[0].mxu0
    %v557 = vadd.f32 0.0, %v556
    %558 = vdwg.mxu0
    %559 = vmatprep.subr.mxu0 0.0
    %560 = vmatpush1.msra.mxu0 %v403
    %561 = vmatprep.subr.mxu0 0.0
    %562 = vmatpush1.msra.mxu0 %v406
    %563 = vmatprep.subr.mxu0 0.0
    %564 = vmatpush1.msra.mxu0 %v409
    %565 = vmatprep.subr.mxu0 0.0
    %566 = vmatpush1.msra.mxu0 %v412
    %567 = vmatprep.subr.mxu0 0.0
    %568 = vmatpush1.msra.mxu0 0.0
    %569 = vmatprep.subr.mxu0 0.0
    %570 = vmatpush1.msra.mxu0 0.0
    %571 = vmatprep.subr.mxu0 0.0
    %572 = vmatpush1.msra.mxu0 0.0
    %573 = vmatprep.subr.mxu0 0.0
    %574 = vmatpush1.msra.mxu0 0.0
    %575 = vmatprep.subr.mxu0 0.0
    %576 = vmatpush1.msra.mxu0 0.0
    %577 = vmatprep.subr.mxu0 0.0
    %578 = vmatpush1.msra.mxu0 0.0
    %579 = vmatprep.subr.mxu0 0.0
    %580 = vmatpush1.msra.mxu0 0.0
    %581 = vmatprep.subr.mxu0 0.0
    %582 = vmatpush1.msra.mxu0 0.0
    %583 = vmatprep.subr.mxu0 0.0
    %584 = vmatpush1.msra.mxu0 0.0
    %585 = vmatprep.subr.mxu0 0.0
    %586 = vmatpush1.msra.mxu0 0.0
    %587 = vmatprep.subr.mxu0 0.0
    %588 = vmatpush1.msra.mxu0 0.0
    %589 = vmatprep.subr.mxu0 0.0
    %590 = vmatpush1.msra.mxu0 0.0
    %591 = vmatprep.subr.mxu0 0.0
    %592 = vmatpush1.msra.mxu0 0.0
    %593 = vmatprep.subr.mxu0 0.0
    %594 = vmatpush1.msra.mxu0 0.0
    %595 = vmatprep.subr.mxu0 0.0
    %596 = vmatpush1.msra.mxu0 0.0
    %597 = vmatprep.subr.mxu0 0.0
    %598 = vmatpush1.msra.mxu0 0.0
    %599 = vmatprep.subr.mxu0 0.0
    %600 = vmatpush1.msra.mxu0 0.0
    %601 = vmatprep.subr.mxu0 0.0
    %602 = vmatpush1.msra.mxu0 0.0
    %603 = vmatprep.subr.mxu0 0.0
    %604 = vmatpush1.msra.mxu0 0.0
    %605 = vmatprep.subr.mxu0 0.0
    %606 = vmatpush1.msra.mxu0 0.0
    %607 = vmatprep.subr.mxu0 0.0
    %608 = vmatpush1.msra.mxu0 0.0
    %609 = vmatprep.subr.mxu0 0.0
    %610 = vmatpush1.msra.mxu0 0.0
    %611 = vmatprep.subr.mxu0 0.0
    %612 = vmatpush1.msra.mxu0 0.0
    %613 = vmatprep.subr.mxu0 0.0
    %614 = vmatpush1.msra.mxu0 0.0
    %615 = vmatprep.subr.mxu0 0.0
    %616 = vmatpush1.msra.mxu0 0.0
    %617 = vmatprep.subr.mxu0 0.0
    %618 = vmatpush1.msra.mxu0 0.0
    %619 = vmatprep.subr.mxu0 0.0
    %620 = vmatpush1.msra.mxu0 0.0
    %621 = vmatprep.subr.mxu0 0.0
    %622 = vmatpush1.msra.mxu0 0.0
    %623 = vmatprep.mubr.f32.mxu0 0.0
    %624 = vmatmul.mubr.f32.gmra.mrb[0].mxu0 %v423
    %v625 = vpop.f32.mrb[0].mxu0
    %v626 = vadd.f32 0.0, %v625
    %v627 = vpop.f32.mrb[0].mxu0
    %628 = vmatprep.mubr.f32.mxu0 0.0
    %629 = vmatmul.mubr.f32.gmra.mrb[0].mxu0 %v426
    %v630 = vpop.f32.mrb[0].mxu0
    %v631 = vadd.f32 0.0, %v630
    %v632 = vpop.f32.mrb[0].mxu0
    %633 = vmatprep.mubr.f32.mxu0 0.0
    %634 = vmatmul.mubr.f32.gmra.mrb[0].mxu0 %v429
    %v635 = vpop.f32.mrb[0].mxu0
    %v636 = vadd.f32 0.0, %v635
    %v637 = vpop.f32.mrb[0].mxu0
    %638 = vmatprep.mubr.f32.mxu0 0.0
    %639 = vmatmul.mubr.f32.gmra.mrb[0].mxu0 %v432
    %v640 = vpop.f32.mrb[0].mxu0
    %v641 = vadd.f32 0.0, %v640
    %v642 = vpop.f32.mrb[0].mxu0
    %643 = vmatprep.mubr.f32.mxu0 0.0
    %644 = vmatmul.mubr.f32.gmra.mrb[0].mxu0 %v435
    %v645 = vpop.f32.mrb[0].mxu0
    %v646 = vadd.f32 0.0, %v645
    %v647 = vpop.f32.mrb[0].mxu0
    %648 = vmatprep.mubr.f32.mxu0 0.0
    %649 = vmatmul.mubr.f32.gmra.mrb[0].mxu0 %v438
    %v650 = vpop.f32.mrb[0].mxu0
    %v651 = vadd.f32 0.0, %v650
    %v652 = vpop.f32.mrb[0].mxu0
    %653 = vmatprep.mubr.f32.mxu0 0.0
    %654 = vmatmul.mubr.f32.gmra.mrb[0].mxu0 %v441
    %v655 = vpop.f32.mrb[0].mxu0
    %v656 = vadd.f32 0.0, %v655
    %v657 = vpop.f32.mrb[0].mxu0
    %658 = vmatprep.mubr.f32.mxu0 0.0
    %659 = vmatmul.mubr.f32.gmra.mrb[0].mxu0 %v444
    %v660 = vpop.f32.mrb[0].mxu0
    %v661 = vadd.f32 0.0, %v660
    %v662 = vpop.f32.mrb[0].mxu0
    %663 = vdwg.mxu0
    %v664 = vtanh.pop %v513
    %v665 = vtanh.pop %v515
    %v666 = vtanh.pop %v626
    %v667 = vtanh.pop %v519
    %v668 = vtanh.pop %v521
    %v669 = vtanh.pop %v631
    %v670 = vtanh.pop %v525
    %v671 = vtanh.pop %v527
    %v672 = vtanh.pop %v636
    %v673 = vtanh.pop %v531
    %v674 = vtanh.pop %v533
    %v675 = vtanh.pop %v641
    %v676 = vtanh.pop %v537
    %v677 = vtanh.pop %v539
    %v678 = vtanh.pop %v646
    %v679 = vtanh.pop %v543
    %v680 = vtanh.pop %v545
    %v681 = vtanh.pop %v651
    %v682 = vtanh.pop %v549
    %v683 = vtanh.pop %v551
    %v684 = vtanh.pop %v656
    %v685 = vtanh.pop %v555
    %v686 = vtanh.pop %v557
    %v687 = vtanh.pop %v661
    %v688 = vld [vmem:[%s3] sm:$0xff]
    %v689 = vld [vmem:[%s3 + $0x8] sm:$0xff]
    %v690 = vld [vmem:[%s3 + $0x10] sm:$0xff]
    %v691 = vld [vmem:[%s3 + $0x18] sm:$0xff]
    %v692 = vld [vmem:[%s3 + $0x20] sm:$0xff]
    %v693 = vld [vmem:[%s3 + $0x28] sm:$0xff]
    %v694 = vld [vmem:[%s3 + $0x30] sm:$0xff]
    %v695 = vld [vmem:[%s3 + $0x38] sm:$0xff]
    %vm696 = vcmask 523264
    %v698 = vsel %vm696, %v688, 0
    %v701 = vsel %vm696, %v689, 0
    %v704 = vsel %vm696, %v690, 0
    %v707 = vsel %vm696, %v691, 0
    %v710 = vsel %vm696, %v692, 0
    %v713 = vsel %vm696, %v693, 0
    %v716 = vsel %vm696, %v694, 0
    %v719 = vsel %vm696, %v695, 0
    %721 = vmatprep.subr.mxu0 %v665
    %722 = vmatpush1.msra.mxu0 %v664
    %723 = vmatprep.subr.mxu0 %v668
    %724 = vmatpush1.msra.mxu0 %v667
    %725 = vmatprep.subr.mxu0 %v671
    %726 = vmatpush1.msra.mxu0 %v670
    %727 = vmatprep.subr.mxu0 %v674
    %728 = vmatpush1.msra.mxu0 %v673
    %729 = vmatprep.subr.mxu0 %v677
    %730 = vmatpush1.msra.mxu0 %v676
    %731 = vmatprep.subr.mxu0 %v680
    %732 = vmatpush1.msra.mxu0 %v679
    %733 = vmatprep.subr.mxu0 %v683
    %734 = vmatpush1.msra.mxu0 %v682
    %735 = vmatprep.subr.mxu0 %v686
    %736 = vmatpush1.msra.mxu0 %v685
    %737 = vmatprep.subr.mxu0 0.0
    %738 = vmatpush1.msra.mxu0 0.0
    %739 = vmatprep.subr.mxu0 0.0
    %740 = vmatpush1.msra.mxu0 0.0
    %741 = vmatprep.subr.mxu0 0.0
    %742 = vmatpush1.msra.mxu0 0.0
    %743 = vmatprep.subr.mxu0 0.0
    %744 = vmatpush1.msra.mxu0 0.0
    %745 = vmatprep.subr.mxu0 0.0
    %746 = vmatpush1.msra.mxu0 0.0
    %747 = vmatprep.subr.mxu0 0.0
    %748 = vmatpush1.msra.mxu0 0.0
    %749 = vmatprep.subr.mxu0 0.0
    %750 = vmatpush1.msra.mxu0 0.0
    %751 = vmatprep.subr.mxu0 0.0
    %752 = vmatpush1.msra.mxu0 0.0
    %753 = vmatprep.subr.mxu0 0.0
    %754 = vmatpush1.msra.mxu0 0.0
    %755 = vmatprep.subr.mxu0 0.0
    %756 = vmatpush1.msra.mxu0 0.0
    %757 = vmatprep.subr.mxu0 0.0
    %758 = vmatpush1.msra.mxu0 0.0
    %759 = vmatprep.subr.mxu0 0.0
    %760 = vmatpush1.msra.mxu0 0.0
    %761 = vmatprep.subr.mxu0 0.0
    %762 = vmatpush1.msra.mxu0 0.0
    %763 = vmatprep.subr.mxu0 0.0
    %764 = vmatpush1.msra.mxu0 0.0
    %765 = vmatprep.subr.mxu0 0.0
    %766 = vmatpush1.msra.mxu0 0.0
    %767 = vmatprep.subr.mxu0 0.0
    %768 = vmatpush1.msra.mxu0 0.0
    %769 = vmatprep.subr.mxu0 0.0
    %770 = vmatpush1.msra.mxu0 0.0
    %771 = vmatprep.subr.mxu0 0.0
    %772 = vmatpush1.msra.mxu0 0.0
    %773 = vmatprep.subr.mxu0 0.0
    %774 = vmatpush1.msra.mxu0 0.0
    %775 = vmatprep.subr.mxu0 0.0
    %776 = vmatpush1.msra.mxu0 0.0
    %777 = vmatprep.subr.mxu0 0.0
    %778 = vmatpush1.msra.mxu0 0.0
    %779 = vmatprep.subr.mxu0 0.0
    %780 = vmatpush1.msra.mxu0 0.0
    %781 = vmatprep.subr.mxu0 0.0
    %782 = vmatpush1.msra.mxu0 0.0
    %783 = vmatprep.subr.mxu0 0.0
    %784 = vmatpush1.msra.mxu0 0.0
    %785 = vmatprep.mubr.f32.mxu0 0.0
    %786 = vmatmul.mubr.f32.gmra.mrb[0].mxu0 %v698
    %v787 = vpop.f32.mrb[0].mxu0
    %v788 = vadd.f32 0.0, %v787
    %v789 = vpop.f32.mrb[0].mxu0
    %v790 = vadd.f32 0.0, %v789
    %791 = vmatprep.mubr.f32.mxu0 0.0
    %792 = vmatmul.mubr.f32.gmra.mrb[0].mxu0 %v701
    %v793 = vpop.f32.mrb[0].mxu0
    %v794 = vadd.f32 0.0, %v793
    %v795 = vpop.f32.mrb[0].mxu0
    %v796 = vadd.f32 0.0, %v795
    %797 = vmatprep.mubr.f32.mxu0 0.0
    %798 = vmatmul.mubr.f32.gmra.mrb[0].mxu0 %v704
    %v799 = vpop.f32.mrb[0].mxu0
    %v800 = vadd.f32 0.0, %v799
    %v801 = vpop.f32.mrb[0].mxu0
    %v802 = vadd.f32 0.0, %v801
    %803 = vmatprep.mubr.f32.mxu0 0.0
    %804 = vmatmul.mubr.f32.gmra.mrb[0].mxu0 %v707
    %v805 = vpop.f32.mrb[0].mxu0
    %v806 = vadd.f32 0.0, %v805
    %v807 = vpop.f32.mrb[0].mxu0
    %v808 = vadd.f32 0.0, %v807
    %809 = vmatprep.mubr.f32.mxu0 0.0
    %810 = vmatmul.mubr.f32.gmra.mrb[0].mxu0 %v710
    %v811 = vpop.f32.mrb[0].mxu0
    %v812 = vadd.f32 0.0, %v811
    %v813 = vpop.f32.mrb[0].mxu0
    %v814 = vadd.f32 0.0, %v813
    %815 = vmatprep.mubr.f32.mxu0 0.0
    %816 = vmatmul.mubr.f32.gmra.mrb[0].mxu0 %v713
    %v817 = vpop.f32.mrb[0].mxu0
    %v818 = vadd.f32 0.0, %v817
    %v819 = vpop.f32.mrb[0].mxu0
    %v820 = vadd.f32 0.0, %v819
    %821 = vmatprep.mubr.f32.mxu0 0.0
    %822 = vmatmul.mubr.f32.gmra.mrb[0].mxu0 %v716
    %v823 = vpop.f32.mrb[0].mxu0
    %v824 = vadd.f32 0.0, %v823
    %v825 = vpop.f32.mrb[0].mxu0
    %v826 = vadd.f32 0.0, %v825
    %827 = vmatprep.mubr.f32.mxu0 0.0
    %828 = vmatmul.mubr.f32.gmra.mrb[0].mxu0 %v719
    %v829 = vpop.f32.mrb[0].mxu0
    %v830 = vadd.f32 0.0, %v829
    %v831 = vpop.f32.mrb[0].mxu0
    %v832 = vadd.f32 0.0, %v831
    %833 = vdwg.mxu0
    %834 = vmatprep.subr.mxu0 0.0
    %835 = vmatpush1.msra.mxu0 %v666
    %836 = vmatprep.subr.mxu0 0.0
    %837 = vmatpush1.msra.mxu0 %v669
    %838 = vmatprep.subr.mxu0 0.0
    %839 = vmatpush1.msra.mxu0 %v672
    %840 = vmatprep.subr.mxu0 0.0
    %841 = vmatpush1.msra.mxu0 %v675
    %842 = vmatprep.subr.mxu0 0.0
    %843 = vmatpush1.msra.mxu0 %v678
    %844 = vmatprep.subr.mxu0 0.0
    %845 = vmatpush1.msra.mxu0 %v681
    %846 = vmatprep.subr.mxu0 0.0
    %847 = vmatpush1.msra.mxu0 %v684
    %848 = vmatprep.subr.mxu0 0.0
    %849 = vmatpush1.msra.mxu0 %v687
    %850 = vmatprep.subr.mxu0 0.0
    %851 = vmatpush1.msra.mxu0 0.0
    %852 = vmatprep.subr.mxu0 0.0
    %853 = vmatpush1.msra.mxu0 0.0
    %854 = vmatprep.subr.mxu0 0.0
    %855 = vmatpush1.msra.mxu0 0.0
    %856 = vmatprep.subr.mxu0 0.0
    %857 = vmatpush1.msra.mxu0 0.0
    %858 = vmatprep.subr.mxu0 0.0
    %859 = vmatpush1.msra.mxu0 0.0
    %860 = vmatprep.subr.mxu0 0.0
    %861 = vmatpush1.msra.mxu0 0.0
    %862 = vmatprep.subr.mxu0 0.0
    %863 = vmatpush1.msra.mxu0 0.0
    %864 = vmatprep.subr.mxu0 0.0
    %865 = vmatpush1.msra.mxu0 0.0
    %866 = vmatprep.subr.mxu0 0.0
    %867 = vmatpush1.msra.mxu0 0.0
    %868 = vmatprep.subr.mxu0 0.0
    %869 = vmatpush1.msra.mxu0 0.0
    %870 = vmatprep.subr.mxu0 0.0
    %871 = vmatpush1.msra.mxu0 0.0
    %872 = vmatprep.subr.mxu0 0.0
    %873 = vmatpush1.msra.mxu0 0.0
    %874 = vmatprep.subr.mxu0 0.0
    %875 = vmatpush1.msra.mxu0 0.0
    %876 = vmatprep.subr.mxu0 0.0
    %877 = vmatpush1.msra.mxu0 0.0
    %878 = vmatprep.subr.mxu0 0.0
    %879 = vmatpush1.msra.mxu0 0.0
    %880 = vmatprep.subr.mxu0 0.0
    %881 = vmatpush1.msra.mxu0 0.0
    %882 = vmatprep.subr.mxu0 0.0
    %883 = vmatpush1.msra.mxu0 0.0
    %884 = vmatprep.subr.mxu0 0.0
    %885 = vmatpush1.msra.mxu0 0.0
    %886 = vmatprep.subr.mxu0 0.0
    %887 = vmatpush1.msra.mxu0 0.0
    %888 = vmatprep.subr.mxu0 0.0
    %889 = vmatpush1.msra.mxu0 0.0
    %890 = vmatprep.subr.mxu0 0.0
    %891 = vmatpush1.msra.mxu0 0.0
    %892 = vmatprep.subr.mxu0 0.0
    %893 = vmatpush1.msra.mxu0 0.0
    %894 = vmatprep.subr.mxu0 0.0
    %895 = vmatpush1.msra.mxu0 0.0
    %896 = vmatprep.subr.mxu0 0.0
    %897 = vmatpush1.msra.mxu0 0.0
    %898 = vmatprep.mubr.f32.mxu0 0.0
    %899 = vmatmul.mubr.f32.gmra.mrb[0].mxu0 %v698
    %v900 = vpop.f32.mrb[0].mxu0
    %v901 = vadd.f32 0.0, %v900
    %v902 = vpop.f32.mrb[0].mxu0
    %903 = vmatprep.mubr.f32.mxu0 0.0
    %904 = vmatmul.mubr.f32.gmra.mrb[0].mxu0 %v701
    %v905 = vpop.f32.mrb[0].mxu0
    %v906 = vadd.f32 0.0, %v905
    %v907 = vpop.f32.mrb[0].mxu0
    %908 = vmatprep.mubr.f32.mxu0 0.0
    %909 = vmatmul.mubr.f32.gmra.mrb[0].mxu0 %v704
    %v910 = vpop.f32.mrb[0].mxu0
    %v911 = vadd.f32 0.0, %v910
    %v912 = vpop.f32.mrb[0].mxu0
    %913 = vmatprep.mubr.f32.mxu0 0.0
    %914 = vmatmul.mubr.f32.gmra.mrb[0].mxu0 %v707
    %v915 = vpop.f32.mrb[0].mxu0
    %v916 = vadd.f32 0.0, %v915
    %v917 = vpop.f32.mrb[0].mxu0
    %918 = vmatprep.mubr.f32.mxu0 0.0
    %919 = vmatmul.mubr.f32.gmra.mrb[0].mxu0 %v710
    %v920 = vpop.f32.mrb[0].mxu0
    %v921 = vadd.f32 0.0, %v920
    %v922 = vpop.f32.mrb[0].mxu0
    %923 = vmatprep.mubr.f32.mxu0 0.0
    %924 = vmatmul.mubr.f32.gmra.mrb[0].mxu0 %v713
    %v925 = vpop.f32.mrb[0].mxu0
    %v926 = vadd.f32 0.0, %v925
    %v927 = vpop.f32.mrb[0].mxu0
    %928 = vmatprep.mubr.f32.mxu0 0.0
    %929 = vmatmul.mubr.f32.gmra.mrb[0].mxu0 %v716
    %v930 = vpop.f32.mrb[0].mxu0
    %v931 = vadd.f32 0.0, %v930
    %v932 = vpop.f32.mrb[0].mxu0
    %933 = vmatprep.mubr.f32.mxu0 0.0
    %934 = vmatmul.mubr.f32.gmra.mrb[0].mxu0 %v719
    %v935 = vpop.f32.mrb[0].mxu0
    %v936 = vadd.f32 0.0, %v935
    %v937 = vpop.f32.mrb[0].mxu0
    %938 = vdwg.mxu0
    %v939 = vtanh.pop %v788
    %v940 = vtanh.pop %v790
    %v941 = vtanh.pop %v901
    %v942 = vtanh.pop %v794
    %v943 = vtanh.pop %v796
    %v944 = vtanh.pop %v906
    %v945 = vtanh.pop %v800
    %v946 = vtanh.pop %v802
    %v947 = vtanh.pop %v911
    %v948 = vtanh.pop %v806
    %v949 = vtanh.pop %v808
    %v950 = vtanh.pop %v916
    %v951 = vtanh.pop %v812
    %v952 = vtanh.pop %v814
    %v953 = vtanh.pop %v921
    %v954 = vtanh.pop %v818
    %v955 = vtanh.pop %v820
    %v956 = vtanh.pop %v926
    %v957 = vtanh.pop %v824
    %v958 = vtanh.pop %v826
    %v959 = vtanh.pop %v931
    %v960 = vtanh.pop %v830
    %v961 = vtanh.pop %v832
    %v962 = vtanh.pop %v936
    %v963 = vmul.f32 %v939, %v939
    %v964 = vmul.f32 %v940, %v940
    %v965 = vmul.f32 %v941, %v941
    %v966 = vmul.f32 %v942, %v942
    %v967 = vmul.f32 %v943, %v943
    %v968 = vmul.f32 %v944, %v944
    %v969 = vmul.f32 %v945, %v945
    %v970 = vmul.f32 %v946, %v946
    %v971 = vmul.f32 %v947, %v947
    %v972 = vmul.f32 %v948, %v948
    %v973 = vmul.f32 %v949, %v949
    %v974 = vmul.f32 %v950, %v950
    %v975 = vmul.f32 %v951, %v951
    %v976 = vmul.f32 %v952, %v952
    %v977 = vmul.f32 %v953, %v953
    %v978 = vmul.f32 %v954, %v954
    %v979 = vmul.f32 %v955, %v955
    %v980 = vmul.f32 %v956, %v956
    %v981 = vmul.f32 %v957, %v957
    %v982 = vmul.f32 %v958, %v958
    %v983 = vmul.f32 %v959, %v959
    %v984 = vmul.f32 %v960, %v960
    %v985 = vmul.f32 %v961, %v961
    %v986 = vmul.f32 %v962, %v962
    %v987 = vadd.f32 %v963, %v966
    %v988 = vadd.f32 %v987, %v969
    %v989 = vadd.f32 %v988, %v972
    %v990 = vadd.f32 %v989, %v975
    %v991 = vadd.f32 %v990, %v978
    %v992 = vadd.f32 %v991, %v981
    %v993 = vadd.f32 %v992, %v984
    %v994 = vrot.slane %v993, 4
    %v995 = vadd.f32 %v993, %v994
    %v996 = vrot.slane %v995, 2
    %v997 = vadd.f32 %v995, %v996
    %v998 = vrot.slane %v997, 1
    %v999 = vadd.f32 %v997, %v998
    %v1000 = vadd.f32 %v964, %v967
    %v1001 = vadd.f32 %v1000, %v970
    %v1002 = vadd.f32 %v1001, %v973
    %v1003 = vadd.f32 %v1002, %v976
    %v1004 = vadd.f32 %v1003, %v979
    %v1005 = vadd.f32 %v1004, %v982
    %v1006 = vadd.f32 %v1005, %v985
    %v1007 = vrot.slane %v1006, 4
    %v1008 = vadd.f32 %v1006, %v1007
    %v1009 = vrot.slane %v1008, 2
    %v1010 = vadd.f32 %v1008, %v1009
    %v1011 = vrot.slane %v1010, 1
    %v1012 = vadd.f32 %v1010, %v1011
    %v1013 = vadd.f32 %v965, %v968
    %v1014 = vadd.f32 %v1013, %v971
    %v1015 = vadd.f32 %v1014, %v974
    %v1016 = vadd.f32 %v1015, %v977
    %v1017 = vadd.f32 %v1016, %v980
    %v1018 = vadd.f32 %v1017, %v983
    %v1019 = vadd.f32 %v1018, %v986
    %v1020 = vrot.slane %v1019, 4
    %v1021 = vadd.f32 %v1019, %v1020
    %v1022 = vrot.slane %v1021, 2
    %v1023 = vadd.f32 %v1021, %v1022
    %v1024 = vrot.slane %v1023, 1
    %v1025 = vadd.f32 %v1023, %v1024
    %v1029 = vcombine.low %v999, %v1012
    %v1031 = vunpack.c.l.s4 1966171168
    %v1032 = vunpack.c.0.s8 %v1031
    %v1033 = vlaneseq
    %v1034 = vshrl.u32 %v1033, 7
    %v1035 = vsub.s32 %v1032, %v1034
    %v1036 = vrot.slane %v1029, %v1035
    %v1038 = vunpack.c.l.s4 1966171168
    %v1039 = vunpack.c.0.s8 %v1038
    %v1040 = vlaneseq
    %v1041 = vshrl.u32 %v1040, 7
    %v1042 = vsub.s32 %v1039, %v1041
    %v1043 = vrot.slane %v1025, %v1042
    %v1044 = vcombine.low %v1036, %v1043
    %v1046 = vunpack.c.l.s4 1966171168
    %v1047 = vunpack.c.0.s8 %v1046
    %v1048 = vlaneseq
    %v1049 = vshrl.u32 %v1048, 7
    %v1050 = vsub.s32 %v1047, %v1049
    %v1051 = vrot.slane %v1044, %v1050
    %v1053 = vlaneseq
    %vm1054 = vcmp.ge.s32.totalorder %v1053, 0
    %vm1055 = vcmp.lt.s32.totalorder %v1053, 384
    %vm1056 = vmand %vm1054, %vm1055
    %1057 = vst.msk [vmem:[#allocation2] sm:$0x7] %vm1056, %v1051
    // Predicated region
    $region18: #{tpu_custom_call.1} parent=1 // pred_check
      _
    $region19: #{tpu_custom_call.1} parent=1 // pred_check_branch
      %1059 = sbr.rel (0) target = $region21
    $region20: #{tpu_custom_call.1} parent=1 // pred_region
      %s1061 = ssub.s32 48, 48
      %1062 = vsyncadd [#allocation3], %s1061
      %s1064 = sshll.u32 [#allocation2], 4
      %s1065 = int_to_ptr.vmem [resolvable:$true] %s1064
      %1067 = dma.vmem_to_hbm [thread:$0]  %s1065, 48, %s4, [#allocation3]
    $region21: #{tpu_custom_call.1} parent=1 // pred_fallthru
      _
    // Predicated region
    $region22: #{tpu_custom_call.1} parent=1 // pred_check
      _
    $region23: #{tpu_custom_call.1} parent=1 // pred_check_branch
      %1069 = sbr.rel (0) target = $region25
    $region24: #{tpu_custom_call.1} parent=1 // pred_region
      %1070 = dma.done [#allocation3], 48
    $region25: #{tpu_custom_call.1} parent=1 // pred_fallthru
      _
    %1071 = vsyncpa [#allocation3], 1

</llo_original>
